<compile_context>
chip_gen: v7x
topology: tpu7x:2x2x1
jax: 0.10.0
libtpu: 0.0.40
codegen_flags: <defaults>
</compile_context>

<pallas_src>
import jax
import jax.numpy as jnp
from jax.experimental import pallas as pl
from jax.experimental.pallas import tpu as pltpu


def _round_up(x, m):
    return ((x + m - 1) // m) * m


def _mlp_kernel(xt_ref, w1_ref, b1_ref, w2_ref, b2_ref, w3_ref, b3_ref, o_ref):
    # Transposed layout: batch on lanes.
    #   xt_ref : (input_size, BM)    compute dtype (bf16)
    #   wN_ref : (out_dim, in_dim)   compute dtype (PyTorch nn.Linear layout)
    #   bN_ref : (out_dim, 1)        f32
    #   o_ref  : (num_classes, BM)   f32
    x = xt_ref[...]

    # Layer 1: Linear + Tanh (f32 accumulate, f32 activation)
    h = jnp.dot(w1_ref[...], x, preferred_element_type=jnp.float32)
    h = jnp.tanh(h + b1_ref[...])

    # Layer 2: Linear + Tanh
    h = jnp.dot(w2_ref[...], h.astype(w2_ref.dtype),
                preferred_element_type=jnp.float32)
    h = jnp.tanh(h + b2_ref[...])

    # Layer 3: Linear (no activation)
    out = jnp.dot(w3_ref[...], h.astype(w3_ref.dtype),
                  preferred_element_type=jnp.float32)
    o_ref[...] = (out + b3_ref[...]).astype(o_ref.dtype)


def neural_net_forward(x, params, *, block_b=512, compute_dtype=jnp.bfloat16):
    """Forward pass of NeuralNet.

    x:      (B, input_size) float32 (same layout as the PyTorch module input)
    params: PyTorch-layout weights:  wN (out, in),  bN (out,)
    returns (B, num_classes) in x.dtype.
    """
    w1, b1 = params["w1"], params["b1"]
    w2, b2 = params["w2"], params["b2"]
    w3, b3 = params["w3"], params["b3"]

    B, input_size = x.shape
    hidden = w1.shape[0]
    num_classes = w3.shape[0]

    # Batch tile on the lane axis: multiple of 128 for lane-dense stores.
    bm = min(block_b, _round_up(B, 128))
    padded_b = _round_up(B, bm)

    # Layout plumbing in the wrapper: transpose so batch is the last (lane)
    # axis, cast matmul operands to bf16, pad batch to a whole number of tiles.
    xt = x.T.astype(compute_dtype)  # (input_size, B)
    if padded_b != B:
        xt = jnp.pad(xt, ((0, 0), (0, padded_b - B)))

    w1c = w1.astype(compute_dtype)
    w2c = w2.astype(compute_dtype)
    w3c = w3.astype(compute_dtype)
    b1c = b1.reshape(hidden, 1).astype(jnp.float32)
    b2c = b2.reshape(hidden, 1).astype(jnp.float32)
    b3c = b3.reshape(num_classes, 1).astype(jnp.float32)

    grid = (padded_b // bm,)

    def resident(a):
        # Constant index_map -> DMA'd once, stays VMEM-resident across the grid.
        return pl.BlockSpec(a.shape, lambda i: (0,) * a.ndim)

    out_t = pl.pallas_call(
        _mlp_kernel,
        out_shape=jax.ShapeDtypeStruct((num_classes, padded_b), jnp.float32),
        grid=grid,
        in_specs=[
            pl.BlockSpec((input_size, bm), lambda i: (0, i)),  # x tile
            resident(w1c), resident(b1c),
            resident(w2c), resident(b2c),
            resident(w3c), resident(b3c),
        ],
        out_specs=pl.BlockSpec((num_classes, bm), lambda i: (0, i)),
        compiler_params=pltpu.CompilerParams(
            dimension_semantics=("parallel",),
        ),
    )(xt, w1c, b1c, w2c, b2c, w3c, b3c)

    # Back to PyTorch layout: (B, num_classes).
    return out_t[:, :B].T.astype(x.dtype)


def init_params(key, input_size, hidden_size, num_classes):
    """nn.Linear-style init, stored in PyTorch layout: w (out, in), b (out,)."""
    keys = jax.random.split(key, 6)

    def linear(kw, kb, fan_in, fan_out):
        bound = 1.0 / jnp.sqrt(jnp.float32(fan_in))
        w = jax.random.uniform(kw, (fan_out, fan_in), jnp.float32, -bound, bound)
        b = jax.random.uniform(kb, (fan_out,), jnp.float32, -bound, bound)
        return w, b

    w1, b1 = linear(keys[0], keys[1], input_size, hidden_size)
    w2, b2 = linear(keys[2], keys[3], hidden_size, hidden_size)
    w3, b3 = linear(keys[4], keys[5], hidden_size, num_classes)
    return {"w1": w1, "b1": b1, "w2": w2, "b2": b2, "w3": w3, "b3": b3}


def _reference_forward(x, params, compute_dtype=jnp.bfloat16):
    """Pure-JAX reference mirroring the kernel's bf16-matmul / f32-accumulate math."""
    def q(a):  # simulate the bf16 cast of matmul operands
        return a.astype(compute_dtype).astype(jnp.float32)

    h = q(x)
    h = jnp.tanh(h @ q(params["w1"]).T + params["b1"][None, :])
    h = jnp.tanh(q(h) @ q(params["w2"]).T + params["b2"][None, :])
    out = q(h) @ q(params["w3"]).T + params["b3"][None, :]
    return out


if __name__ == "__main__":
    # Small shapes consistent with the bag-of-words chatbot classifier.
    # NOTE: at this batch size the pallas_call is pure launch overhead; the
    # kernel only pays off once B is in the thousands (see perf review).
    batch = 8
    input_size = 64
    hidden_size = 32
    num_classes = 8

    key = jax.random.PRNGKey(0)
    k_x, k_p = jax.random.split(key)
    x = jax.random.normal(k_x, (batch, input_size), jnp.float32)
    params = init_params(k_p, input_size, hidden_size, num_classes)

    out = neural_net_forward(x, params)
    out = jax.block_until_ready(out)

    ref = _reference_forward(x, params)
    assert out.shape == (batch, num_classes)
    assert jnp.allclose(out, ref, atol=1e-3, rtol=1e-3), (
        f"max abs diff {jnp.max(jnp.abs(out - ref))}"
    )

    print("KERNEL_OK")
</pallas_src>

<mosaic_0001>
module attributes {stable_mosaic.version = 11 : i64} {
  func.func @_mlp_kernel(%arg0: i32, %arg1: memref<64x128xbf16, #tpu.memory_space<vmem>>, %arg2: memref<32x64xbf16, #tpu.memory_space<vmem>>, %arg3: memref<32x1xf32, #tpu.memory_space<vmem>>, %arg4: memref<32x32xbf16, #tpu.memory_space<vmem>>, %arg5: memref<32x1xf32, #tpu.memory_space<vmem>>, %arg6: memref<8x32xbf16, #tpu.memory_space<vmem>>, %arg7: memref<8x1xf32, #tpu.memory_space<vmem>>, %arg8: memref<8x128xf32, #tpu.memory_space<vmem>>) attributes {dimension_semantics = [#tpu.dimension_semantics<parallel>], iteration_bounds = array<i64: 1>, scalar_prefetch = 0 : i64, scratch_operands = 0 : i64, tpu.core_type = #tpu.core_type<tc>, window_params = [{transform_indices = @transform_0, window_bounds = array<i64: 64, 128>}, {pipeline_mode = #tpu.pipeline_mode<synchronous>, transform_indices = @transform_1, window_bounds = array<i64: 32, 64>}, {pipeline_mode = #tpu.pipeline_mode<synchronous>, transform_indices = @transform_2, window_bounds = array<i64: 32, 1>}, {pipeline_mode = #tpu.pipeline_mode<synchronous>, transform_indices = @transform_3, window_bounds = array<i64: 32, 32>}, {pipeline_mode = #tpu.pipeline_mode<synchronous>, transform_indices = @transform_4, window_bounds = array<i64: 32, 1>}, {pipeline_mode = #tpu.pipeline_mode<synchronous>, transform_indices = @transform_5, window_bounds = array<i64: 8, 32>}, {pipeline_mode = #tpu.pipeline_mode<synchronous>, transform_indices = @transform_6, window_bounds = array<i64: 8, 1>}, {transform_indices = @transform_7, window_bounds = array<i64: 8, 128>}]} {
    %c0 = arith.constant 0 : index
    %c0_0 = arith.constant 0 : index
    %0 = vector.load %arg1[%c0, %c0_0] : memref<64x128xbf16, #tpu.memory_space<vmem>>, vector<64x128xbf16>
    %c0_1 = arith.constant 0 : index
    %c0_2 = arith.constant 0 : index
    %1 = vector.load %arg2[%c0_1, %c0_2] : memref<32x64xbf16, #tpu.memory_space<vmem>>, vector<32x64xbf16>
    %cst = arith.constant dense<0.000000e+00> : vector<32x128xf32>
    %2 = tpu.matmul %1, %0, %cst {dimension_numbers = #tpu.dot_dimension_numbers<[1], [0], [0], [1], [0, 0, 1, 1], [], []>} : vector<32x64xbf16>, vector<64x128xbf16>, vector<32x128xf32> -> vector<32x128xf32>
    %c0_3 = arith.constant 0 : index
    %c0_4 = arith.constant 0 : index
    %3 = vector.load %arg3[%c0_3, %c0_4] : memref<32x1xf32, #tpu.memory_space<vmem>>, vector<32x1xf32>
    %4 = vector.broadcast %3 : vector<32x1xf32> to vector<32x128xf32>
    %5 = arith.addf %2, %4 : vector<32x128xf32>
    %6 = math.tanh %5 : vector<32x128xf32>
    %c0_5 = arith.constant 0 : index
    %c0_6 = arith.constant 0 : index
    %7 = vector.load %arg4[%c0_5, %c0_6] : memref<32x32xbf16, #tpu.memory_space<vmem>>, vector<32x32xbf16>
    %8 = arith.truncf %6 : vector<32x128xf32> to vector<32x128xbf16>
    %cst_7 = arith.constant dense<0.000000e+00> : vector<32x128xf32>
    %9 = tpu.matmul %7, %8, %cst_7 {dimension_numbers = #tpu.dot_dimension_numbers<[1], [0], [0], [1], [0, 0, 1, 1], [], []>} : vector<32x32xbf16>, vector<32x128xbf16>, vector<32x128xf32> -> vector<32x128xf32>
    %c0_8 = arith.constant 0 : index
    %c0_9 = arith.constant 0 : index
    %10 = vector.load %arg5[%c0_8, %c0_9] : memref<32x1xf32, #tpu.memory_space<vmem>>, vector<32x1xf32>
    %11 = vector.broadcast %10 : vector<32x1xf32> to vector<32x128xf32>
    %12 = arith.addf %9, %11 : vector<32x128xf32>
    %13 = math.tanh %12 : vector<32x128xf32>
    %c0_10 = arith.constant 0 : index
    %c0_11 = arith.constant 0 : index
    %14 = vector.load %arg6[%c0_10, %c0_11] : memref<8x32xbf16, #tpu.memory_space<vmem>>, vector<8x32xbf16>
    %15 = arith.truncf %13 : vector<32x128xf32> to vector<32x128xbf16>
    %cst_12 = arith.constant dense<0.000000e+00> : vector<8x128xf32>
    %16 = tpu.matmul %14, %15, %cst_12 {dimension_numbers = #tpu.dot_dimension_numbers<[1], [0], [0], [1], [0, 0, 1, 1], [], []>} : vector<8x32xbf16>, vector<32x128xbf16>, vector<8x128xf32> -> vector<8x128xf32>
    %c0_13 = arith.constant 0 : index
    %c0_14 = arith.constant 0 : index
    %17 = vector.load %arg7[%c0_13, %c0_14] : memref<8x1xf32, #tpu.memory_space<vmem>>, vector<8x1xf32>
    %18 = vector.broadcast %17 : vector<8x1xf32> to vector<8x128xf32>
    %19 = arith.addf %16, %18 : vector<8x128xf32>
    %c0_15 = arith.constant 0 : index
    %c0_16 = arith.constant 0 : index
    %20 = vector.load %arg8[%c0_15, %c0_16] : memref<8x128xf32, #tpu.memory_space<vmem>>, vector<8x128xf32>
    tpu.vector_store %arg8[%c0_15, %c0_16], %19 {strides = array<i32>} : memref<8x128xf32, #tpu.memory_space<vmem>>, vector<8x128xf32>,
    return
  }
  func.func @transform_0(%arg0: i32) -> (i32, i32) {
    %c0_i32 = arith.constant 0 : i32
    %c0_i32_0 = arith.constant 0 : i32
    return %c0_i32, %arg0 : i32, i32
  }
  func.func @transform_1(%arg0: i32) -> (i32, i32) {
    %c0_i32 = arith.constant 0 : i32
    %c0_i32_0 = arith.constant 0 : i32
    %c0_i32_1 = arith.constant 0 : i32
    return %c0_i32, %c0_i32_0 : i32, i32
  }
  func.func @transform_2(%arg0: i32) -> (i32, i32) {
    %c0_i32 = arith.constant 0 : i32
    %c0_i32_0 = arith.constant 0 : i32
    %c0_i32_1 = arith.constant 0 : i32
    return %c0_i32, %c0_i32_0 : i32, i32
  }
  func.func @transform_3(%arg0: i32) -> (i32, i32) {
    %c0_i32 = arith.constant 0 : i32
    %c0_i32_0 = arith.constant 0 : i32
    %c0_i32_1 = arith.constant 0 : i32
    return %c0_i32, %c0_i32_0 : i32, i32
  }
  func.func @transform_4(%arg0: i32) -> (i32, i32) {
    %c0_i32 = arith.constant 0 : i32
    %c0_i32_0 = arith.constant 0 : i32
    %c0_i32_1 = arith.constant 0 : i32
    return %c0_i32, %c0_i32_0 : i32, i32
  }
  func.func @transform_5(%arg0: i32) -> (i32, i32) {
    %c0_i32 = arith.constant 0 : i32
    %c0_i32_0 = arith.constant 0 : i32
    %c0_i32_1 = arith.constant 0 : i32
    return %c0_i32, %c0_i32_0 : i32, i32
  }
  func.func @transform_6(%arg0: i32) -> (i32, i32) {
    %c0_i32 = arith.constant 0 : i32
    %c0_i32_0 = arith.constant 0 : i32
    %c0_i32_1 = arith.constant 0 : i32
    return %c0_i32, %c0_i32_0 : i32, i32
  }
  func.func @transform_7(%arg0: i32) -> (i32, i32) {
    %c0_i32 = arith.constant 0 : i32
    %c0_i32_0 = arith.constant 0 : i32
    return %c0_i32, %arg0 : i32, i32
  }
}

</mosaic_0001>

<llo_original>
// kernel: tpu_custom_call.1
$region0: #{tpu_custom_call.1}
  #allocation0 [shape = 'u32[]', space=smem, size = 0x4, offset = 0x4, fixed_abs, tag = 'smem constant byte address 0x4 - core index']
  #allocation1 [shape = 'u32[144,128]{1,0:T(1,128)}', space=vmem, size = 0x12000, scoped, tag = 'internal scratch']
  %s0 = inlined_call_operand.vmem [shape: bf16[64,128], index: 0, kind: input, shape index: {}]
  %s1 = inlined_call_operand.vmem [shape: bf16[32,64], index: 1, kind: input, shape index: {}]
  %s2 = inlined_call_operand.vmem [shape: f32[32,1], index: 2, kind: input, shape index: {}]
  %s3 = inlined_call_operand.vmem [shape: bf16[32,32], index: 3, kind: input, shape index: {}]
  %s4 = inlined_call_operand.vmem [shape: f32[32,1], index: 4, kind: input, shape index: {}]
  %s5 = inlined_call_operand.vmem [shape: bf16[8,32], index: 5, kind: input, shape index: {}]
  %s6 = inlined_call_operand.vmem [shape: f32[8,1], index: 6, kind: input, shape index: {}]
  %s7 = inlined_call_operand.hbm [shape: f32[8,128], index: 7, kind: output, shape index: {}]
  %s8 = sld [smem:[#allocation0]]
  $region38: #{tpu_custom_call.1} parent=0
    _
  %s10 = ssub.s32 1, %s8
  %s11 = scalar_select 0, %s10, %s8
  $region1: #{tpu_custom_call.1} parent=0
    #allocation2 [shape = 'u8[4096]{0}', space=vmem, size = 0x1000, scoped, tag = 'output window, operand 0, single buffered']
    #allocation3 [shape = 's32[1]{0}', space=sflag, size = 0x4, scoped, tag = 'scoped memory for tpu_custom_call.1']
    %12 = vsyncpa [#allocation3], 0
    // Predicated region
    $region2: #{tpu_custom_call.1} parent=1 // pred_check
      _
    $region3: #{tpu_custom_call.1} parent=1 // pred_check_branch
      %14 = sbr.rel (0) target = $region5
    $region4: #{tpu_custom_call.1} parent=1 // pred_region
      _
    $region5: #{tpu_custom_call.1} parent=1 // pred_fallthru
      _
    // Predicated region
    $region6: #{tpu_custom_call.1} parent=1 // pred_check
      _
    $region7: #{tpu_custom_call.1} parent=1 // pred_check_branch
      %16 = sbr.rel (0) target = $region9
    $region8: #{tpu_custom_call.1} parent=1 // pred_region
      _
    $region9: #{tpu_custom_call.1} parent=1 // pred_fallthru
      _
    // Predicated region
    $region10: #{tpu_custom_call.1} parent=1 // pred_check
      _
    $region11: #{tpu_custom_call.1} parent=1 // pred_check_branch
      %18 = sbr.rel (0) target = $region13
    $region12: #{tpu_custom_call.1} parent=1 // pred_region
      _
    $region13: #{tpu_custom_call.1} parent=1 // pred_fallthru
      _
    // Predicated region
    $region14: #{tpu_custom_call.1} parent=1 // pred_check
      _
    $region15: #{tpu_custom_call.1} parent=1 // pred_check_branch
      %20 = sbr.rel (0) target = $region17
    $region16: #{tpu_custom_call.1} parent=1 // pred_region
      _
    $region17: #{tpu_custom_call.1} parent=1 // pred_fallthru
      _
    // Predicated region
    $region18: #{tpu_custom_call.1} parent=1 // pred_check
      _
    $region19: #{tpu_custom_call.1} parent=1 // pred_check_branch
      %22 = sbr.rel (0) target = $region21
    $region20: #{tpu_custom_call.1} parent=1 // pred_region
      _
    $region21: #{tpu_custom_call.1} parent=1 // pred_fallthru
      _
    // Predicated region
    $region22: #{tpu_custom_call.1} parent=1 // pred_check
      _
    $region23: #{tpu_custom_call.1} parent=1 // pred_check_branch
      %24 = sbr.rel (0) target = $region25
    $region24: #{tpu_custom_call.1} parent=1 // pred_region
      _
    $region25: #{tpu_custom_call.1} parent=1 // pred_fallthru
      _
    // Predicated region
    $region26: #{tpu_custom_call.1} parent=1 // pred_check
      _
    $region27: #{tpu_custom_call.1} parent=1 // pred_check_branch
      %26 = sbr.rel (0) target = $region29
    $region28: #{tpu_custom_call.1} parent=1 // pred_region
      _
    $region29: #{tpu_custom_call.1} parent=1 // pred_fallthru
      _
    %v28 = vld [vmem:[%s0] sm:$0xf]
    %v29 = vld [vmem:[%s0 + $0x4] sm:$0xf]
    %v30 = vld [vmem:[%s0 + $0x8] sm:$0xf]
    %v31 = vld [vmem:[%s0 + $0xc] sm:$0xf]
    %v32 = vld [vmem:[%s0 + $0x10] sm:$0xf]
    %v33 = vld [vmem:[%s0 + $0x14] sm:$0xf]
    %v34 = vld [vmem:[%s0 + $0x18] sm:$0xf]
    %v35 = vld [vmem:[%s0 + $0x1c] sm:$0xf]
    %v36 = vld [vmem:[%s1] sm:$0xf]
    %v37 = vld [vmem:[%s1 + $0x4] sm:$0xf]
    %v38 = vld [vmem:[%s1 + $0x8] sm:$0xf]
    %v39 = vld [vmem:[%s1 + $0xc] sm:$0xf]
    %v40 = vld [vmem:[%s2] sm:$0xff]
    %v41 = vld [vmem:[%s2 + $0x8] sm:$0xff]
    %v42 = vld [vmem:[%s2 + $0x10] sm:$0xff]
    %v43 = vld [vmem:[%s2 + $0x18] sm:$0xff]
    %45 = vset.pattern.permute.xlu0 0
    %46 = vperm.xlu0 %45, %v40
    %v47 = vpop.permute.xlu0 %46
    %50 = vset.pattern.permute.xlu0 0
    %51 = vperm.xlu0 %50, %v41
    %v52 = vpop.permute.xlu0 %51
    %55 = vset.pattern.permute.xlu0 0
    %56 = vperm.xlu0 %55, %v42
    %v57 = vpop.permute.xlu0 %56
    %60 = vset.pattern.permute.xlu0 0
    %61 = vperm.xlu0 %60, %v43
    %v62 = vpop.permute.xlu0 %61
    %v68 = vunpack.c.l.b16 %v36
    %v69 = vunpack.c.l.b16 %v37
    %v70 = vunpack.c.l.b16 %v38
    %v71 = vunpack.c.l.b16 %v39
    %v72 = vpack.c.b16 %v69, %v68
    %v73 = vpack.c.b16 %v71, %v70
    %v82 = vunpack.c.l.b16 %v28
    %v83 = vunpack.c.l.b16 %v29
    %v84 = vunpack.c.l.b16 %v30
    %v85 = vunpack.c.l.b16 %v31
    %v86 = vunpack.c.l.b16 %v32
    %v87 = vunpack.c.l.b16 %v33
    %v88 = vunpack.c.l.b16 %v34
    %v89 = vunpack.c.l.b16 %v35
    %v90 = vpack.c.b16 %v83, %v82
    %v91 = vpack.c.b16 %v85, %v84
    %v92 = vpack.c.b16 %v87, %v86
    %v93 = vpack.c.b16 %v89, %v88
    %vm98 = vcmask 523264
    %v100 = vsel %vm98, %v72, 0
    %v103 = vsel %vm98, %v73, 0
    %105 = vmatprep.subr.bf16.mxu0 0
    %106 = vmatpush1.bf16.msra.mxu0 %v90
    %107 = vmatprep.subr.bf16.mxu0 0
    %108 = vmatpush1.bf16.msra.mxu0 %v91
    %109 = vmatprep.subr.bf16.mxu0 0
    %110 = vmatpush1.bf16.msra.mxu0 %v92
    %111 = vmatprep.subr.bf16.mxu0 0
    %112 = vmatpush1.bf16.msra.mxu0 %v93
    %113 = vmatprep.subr.bf16.mxu0 0
    %114 = vmatpush1.bf16.msra.mxu0 0
    %115 = vmatprep.subr.bf16.mxu0 0
    %116 = vmatpush1.bf16.msra.mxu0 0
    %117 = vmatprep.subr.bf16.mxu0 0
    %118 = vmatpush1.bf16.msra.mxu0 0
    %119 = vmatprep.subr.bf16.mxu0 0
    %120 = vmatpush1.bf16.msra.mxu0 0
    %121 = vmatprep.subr.bf16.mxu0 0
    %122 = vmatpush1.bf16.msra.mxu0 0
    %123 = vmatprep.subr.bf16.mxu0 0
    %124 = vmatpush1.bf16.msra.mxu0 0
    %125 = vmatprep.subr.bf16.mxu0 0
    %126 = vmatpush1.bf16.msra.mxu0 0
    %127 = vmatprep.subr.bf16.mxu0 0
    %128 = vmatpush1.bf16.msra.mxu0 0
    %129 = vmatprep.subr.bf16.mxu0 0
    %130 = vmatpush1.bf16.msra.mxu0 0
    %131 = vmatprep.subr.bf16.mxu0 0
    %132 = vmatpush1.bf16.msra.mxu0 0
    %133 = vmatprep.subr.bf16.mxu0 0
    %134 = vmatpush1.bf16.msra.mxu0 0
    %135 = vmatprep.subr.bf16.mxu0 0
    %136 = vmatpush1.bf16.msra.mxu0 0
    %137 = vmatprep.mubr.bf16.mxu0 0
    %138 = vmatmul.mubr.bf16.gmra.mrb[0].mxu0 %v100
    %v139 = vpop.f32.mrb[0].mxu0
    %v140 = vadd.f32 %v47, %v139
    %v141 = vpop.f32.mrb[0].mxu0
    %v142 = vpop.f32.mrb[0].mxu0
    %v143 = vadd.f32 %v52, %v142
    %v144 = vpop.f32.mrb[0].mxu0
    %145 = vmatprep.mubr.bf16.mxu0 0
    %146 = vmatmul.mubr.bf16.gmra.mrb[0].mxu0 %v103
    %v147 = vpop.f32.mrb[0].mxu0
    %v148 = vadd.f32 %v57, %v147
    %v149 = vpop.f32.mrb[0].mxu0
    %v150 = vpop.f32.mrb[0].mxu0
    %v151 = vadd.f32 %v62, %v150
    %v152 = vpop.f32.mrb[0].mxu0
    %153 = vdwg.mxu0
    %v154 = vtanh.pop %v140
    %v155 = vtanh.pop %v143
    %v156 = vtanh.pop %v148
    %v157 = vtanh.pop %v151
    %v158 = vld [vmem:[%s3] sm:$0xf]
    %v159 = vld [vmem:[%s3 + $0x4] sm:$0xf]
    %v160 = vld [vmem:[%s3 + $0x8] sm:$0xf]
    %v161 = vld [vmem:[%s3 + $0xc] sm:$0xf]
    %v162 = vpack.c.bf16 %v155, %v154
    %v163 = vpack.c.bf16 %v157, %v156
    %v164 = vld [vmem:[%s4] sm:$0xff]
    %v165 = vld [vmem:[%s4 + $0x8] sm:$0xff]
    %v166 = vld [vmem:[%s4 + $0x10] sm:$0xff]
    %v167 = vld [vmem:[%s4 + $0x18] sm:$0xff]
    %169 = vset.pattern.permute.xlu0 0
    %170 = vperm.xlu0 %169, %v164
    %v171 = vpop.permute.xlu0 %170
    %174 = vset.pattern.permute.xlu0 0
    %175 = vperm.xlu0 %174, %v165
    %v176 = vpop.permute.xlu0 %175
    %179 = vset.pattern.permute.xlu0 0
    %180 = vperm.xlu0 %179, %v166
    %v181 = vpop.permute.xlu0 %180
    %184 = vset.pattern.permute.xlu0 0
    %185 = vperm.xlu0 %184, %v167
    %v186 = vpop.permute.xlu0 %185
    %v192 = vunpack.c.l.b16 %v158
    %v193 = vunpack.c.l.b16 %v159
    %v194 = vunpack.c.l.b16 %v160
    %v195 = vunpack.c.l.b16 %v161
    %v196 = vpack.c.b16 %v193, %v192
    %v197 = vpack.c.b16 %v195, %v194
    %vm198 = vcmask 261120
    %v200 = vsel %vm198, %v196, 0
    %v203 = vsel %vm198, %v197, 0
    %205 = vmatprep.subr.bf16.mxu0 0
    %206 = vmatpush1.bf16.msra.mxu0 %v162
    %207 = vmatprep.subr.bf16.mxu0 0
    %208 = vmatpush1.bf16.msra.mxu0 %v163
    %209 = vmatprep.subr.bf16.mxu0 0
    %210 = vmatpush1.bf16.msra.mxu0 0
    %211 = vmatprep.subr.bf16.mxu0 0
    %212 = vmatpush1.bf16.msra.mxu0 0
    %213 = vmatprep.subr.bf16.mxu0 0
    %214 = vmatpush1.bf16.msra.mxu0 0
    %215 = vmatprep.subr.bf16.mxu0 0
    %216 = vmatpush1.bf16.msra.mxu0 0
    %217 = vmatprep.subr.bf16.mxu0 0
    %218 = vmatpush1.bf16.msra.mxu0 0
    %219 = vmatprep.subr.bf16.mxu0 0
    %220 = vmatpush1.bf16.msra.mxu0 0
    %221 = vmatprep.subr.bf16.mxu0 0
    %222 = vmatpush1.bf16.msra.mxu0 0
    %223 = vmatprep.subr.bf16.mxu0 0
    %224 = vmatpush1.bf16.msra.mxu0 0
    %225 = vmatprep.subr.bf16.mxu0 0
    %226 = vmatpush1.bf16.msra.mxu0 0
    %227 = vmatprep.subr.bf16.mxu0 0
    %228 = vmatpush1.bf16.msra.mxu0 0
    %229 = vmatprep.subr.bf16.mxu0 0
    %230 = vmatpush1.bf16.msra.mxu0 0
    %231 = vmatprep.subr.bf16.mxu0 0
    %232 = vmatpush1.bf16.msra.mxu0 0
    %233 = vmatprep.subr.bf16.mxu0 0
    %234 = vmatpush1.bf16.msra.mxu0 0
    %235 = vmatprep.subr.bf16.mxu0 0
    %236 = vmatpush1.bf16.msra.mxu0 0
    %237 = vmatprep.mubr.bf16.mxu0 0
    %238 = vmatmul.mubr.bf16.gmra.mrb[0].mxu0 %v200
    %v239 = vpop.f32.mrb[0].mxu0
    %v240 = vadd.f32 %v171, %v239
    %v241 = vpop.f32.mrb[0].mxu0
    %v242 = vpop.f32.mrb[0].mxu0
    %v243 = vadd.f32 %v176, %v242
    %v244 = vpop.f32.mrb[0].mxu0
    %245 = vmatprep.mubr.bf16.mxu0 0
    %246 = vmatmul.mubr.bf16.gmra.mrb[0].mxu0 %v203
    %v247 = vpop.f32.mrb[0].mxu0
    %v248 = vadd.f32 %v181, %v247
    %v249 = vpop.f32.mrb[0].mxu0
    %v250 = vpop.f32.mrb[0].mxu0
    %v251 = vadd.f32 %v186, %v250
    %v252 = vpop.f32.mrb[0].mxu0
    %253 = vdwg.mxu0
    %v254 = vtanh.pop %v240
    %v255 = vtanh.pop %v243
    %v256 = vtanh.pop %v248
    %v257 = vtanh.pop %v251
    %v258 = vld [vmem:[%s5] sm:$0xf]
    %v259 = vpack.c.bf16 %v255, %v254
    %v260 = vpack.c.bf16 %v257, %v256
    %v261 = vld [vmem:[%s6] sm:$0xff]
    %263 = vset.pattern.permute.xlu0 0
    %264 = vperm.xlu0 %263, %v261
    %v265 = vpop.permute.xlu0 %264
    %v268 = vsel %vm198, %v258, 0
    %270 = vmatprep.subr.bf16.mxu0 0
    %271 = vmatpush1.bf16.msra.mxu0 %v259
    %272 = vmatprep.subr.bf16.mxu0 0
    %273 = vmatpush1.bf16.msra.mxu0 %v260
    %274 = vmatprep.subr.bf16.mxu0 0
    %275 = vmatpush1.bf16.msra.mxu0 0
    %276 = vmatprep.subr.bf16.mxu0 0
    %277 = vmatpush1.bf16.msra.mxu0 0
    %278 = vmatprep.subr.bf16.mxu0 0
    %279 = vmatpush1.bf16.msra.mxu0 0
    %280 = vmatprep.subr.bf16.mxu0 0
    %281 = vmatpush1.bf16.msra.mxu0 0
    %282 = vmatprep.subr.bf16.mxu0 0
    %283 = vmatpush1.bf16.msra.mxu0 0
    %284 = vmatprep.subr.bf16.mxu0 0
    %285 = vmatpush1.bf16.msra.mxu0 0
    %286 = vmatprep.subr.bf16.mxu0 0
    %287 = vmatpush1.bf16.msra.mxu0 0
    %288 = vmatprep.subr.bf16.mxu0 0
    %289 = vmatpush1.bf16.msra.mxu0 0
    %290 = vmatprep.subr.bf16.mxu0 0
    %291 = vmatpush1.bf16.msra.mxu0 0
    %292 = vmatprep.subr.bf16.mxu0 0
    %293 = vmatpush1.bf16.msra.mxu0 0
    %294 = vmatprep.subr.bf16.mxu0 0
    %295 = vmatpush1.bf16.msra.mxu0 0
    %296 = vmatprep.subr.bf16.mxu0 0
    %297 = vmatpush1.bf16.msra.mxu0 0
    %298 = vmatprep.subr.bf16.mxu0 0
    %299 = vmatpush1.bf16.msra.mxu0 0
    %300 = vmatprep.subr.bf16.mxu0 0
    %301 = vmatpush1.bf16.msra.mxu0 0
    %302 = vmatprep.mubr.bf16.mxu0 0
    %303 = vmatmul.mubr.bf16.gmra.mrb[0].mxu0 %v268
    %v304 = vpop.f32.mrb[0].mxu0
    %v305 = vadd.f32 %v265, %v304
    %v306 = vpop.f32.mrb[0].mxu0
    %v307 = vpop.f32.mrb[0].mxu0
    %v308 = vpop.f32.mrb[0].mxu0
    %309 = vdwg.mxu0
    %310 = vst [vmem:[#allocation2] sm:$0xff] %v305
    // Predicated region
    $region30: #{tpu_custom_call.1} parent=1 // pred_check
      _
    $region31: #{tpu_custom_call.1} parent=1 // pred_check_branch
      %312 = sbr.rel (0) target = $region33
    $region32: #{tpu_custom_call.1} parent=1 // pred_region
      %s314 = ssub.s32 128, 128
      %315 = vsyncadd [#allocation3], %s314
      %s317 = sshll.u32 [#allocation2], 4
      %s318 = int_to_ptr.vmem [resolvable:$true] %s317
      %320 = dma.vmem_to_hbm [thread:$0]  %s318, 128, %s7, [#allocation3]
    $region33: #{tpu_custom_call.1} parent=1 // pred_fallthru
      _
    // Predicated region
    $region34: #{tpu_custom_call.1} parent=1 // pred_check
      _
    $region35: #{tpu_custom_call.1} parent=1 // pred_check_branch
      %322 = sbr.rel (0) target = $region37
    $region36: #{tpu_custom_call.1} parent=1 // pred_region
      %323 = dma.done [#allocation3], 128
    $region37: #{tpu_custom_call.1} parent=1 // pred_fallthru
      _
    %324 = vsyncpa [#allocation3], 1

</llo_original>
